<compile_context>
chip_gen: v6e
topology: v6e:2x2x1
jax: 0.10.0
libtpu: 0.0.40
codegen_flags: <defaults>
</compile_context>

<pallas_src>
import functools

import jax
import jax.numpy as jnp
from jax.experimental import pallas as pl
from jax.experimental.pallas import tpu as pltpu


def _rmsnorm_kernel(x_ref, w_ref, o_ref, *, eps, true_hidden):
    # x_ref: (tm, Hpad) input dtype; w_ref: (1, Hpad); o_ref: (tm, Hpad).
    xf = x_ref[...].astype(jnp.float32)
    # Padded lanes (if any) are zero, so sum over Hpad == sum over H.
    var = jnp.sum(xf * xf, axis=-1, keepdims=True) * (1.0 / float(true_hidden))
    inv = jax.lax.rsqrt(var + eps)                       # (tm, 1) f32
    wf = w_ref[...].astype(jnp.float32)                  # (1, Hpad), resident
    # Full-f32 math (PyTorch-exact); single cast at the store.
    o_ref[...] = (wf * (xf * inv)).astype(o_ref.dtype)


def _round_up(x: int, m: int) -> int:
    return ((x + m - 1) // m) * m


def _choose_row_tile(rows: int, hidden_padded: int, itemsize: int) -> int:
    # Sublane packing: 8 rows/vreg for 32-bit, 16 for 16-bit, 32 for 8-bit.
    packing = 8 * max(1, 4 // itemsize)
    # Bytes-based target: ~2 MiB per x/out tile buffer (85%+ of HBM roofline
    # is already reached around 1 MiB tiles), secondary cap at 2048 rows.
    target_bytes = 2 * 1024 * 1024
    tm = target_bytes // max(1, hidden_padded * itemsize)
    tm = min(tm, 2048)
    tm = max(packing, (tm // packing) * packing)
    # Tiny inputs: one block covering all (packing-rounded) rows.
    tm = min(tm, _round_up(rows, packing))
    # v7x: make sure the parallel row axis has >= 2 grid steps (two TCs) when
    # the input isn't tiny; harmless on v5e/v6e (single TC).
    if rows > packing and pl.cdiv(rows, tm) < 2:
        half = _round_up(pl.cdiv(rows, 2), packing)
        tm = max(packing, min(tm, half))
    return tm


def rmsnorm(hidden_states: jax.Array, weight: jax.Array, eps: float = 1e-5) -> jax.Array:
    """RMSNorm over the last axis of `hidden_states` using a Pallas TPU kernel."""
    orig_shape = hidden_states.shape
    hidden = orig_shape[-1]
    assert weight.shape == (hidden,), "weight must match normalized_shape"

    x2d = hidden_states.reshape(-1, hidden)                    # (rows, H)
    rows = x2d.shape[0]
    itemsize = jnp.dtype(hidden_states.dtype).itemsize

    # Lane-dense stores: pad hidden to a multiple of 128 once in the caller.
    hidden_pad = _round_up(hidden, 128)
    if hidden_pad != hidden:
        x2d = jnp.pad(x2d, ((0, 0), (0, hidden_pad - hidden)))
        w2d = jnp.pad(weight.reshape(1, hidden), ((0, 0), (0, hidden_pad - hidden)))
    else:
        w2d = weight.reshape(1, hidden)

    tm = _choose_row_tile(rows, hidden_pad, itemsize)
    grid = (pl.cdiv(rows, tm),)
    rows_proc = grid[0] * tm  # rows actually streamed (incl. masked tail)

    cost = pl.CostEstimate(
        flops=5 * rows_proc * hidden_pad,                      # square+reduce+2 muls
        transcendentals=rows_proc,
        bytes_accessed=2 * rows_proc * hidden_pad * itemsize
        + hidden_pad * jnp.dtype(weight.dtype).itemsize,
    )

    out2d = pl.pallas_call(
        functools.partial(_rmsnorm_kernel, eps=eps, true_hidden=hidden),
        out_shape=jax.ShapeDtypeStruct((rows, hidden_pad), hidden_states.dtype),
        grid_spec=pltpu.PrefetchScalarGridSpec(
            num_scalar_prefetch=0,
            grid=grid,
            in_specs=[
                pl.BlockSpec((tm, hidden_pad), lambda i: (i, 0)),   # x row tile
                pl.BlockSpec((1, hidden_pad), lambda i: (0, 0)),    # weight (resident)
            ],
            out_specs=pl.BlockSpec((tm, hidden_pad), lambda i: (i, 0)),
        ),
        compiler_params=pltpu.CompilerParams(
            # "parallel" lets the row axis shard across both TensorCores on v7x.
            dimension_semantics=("parallel",),
            # ~2 MiB tiles (x/out double-buffered) + f32 intermediates fit
            # comfortably; 32 MiB leaves headroom on v7x's 64 MiB VMEM too.
            vmem_limit_bytes=32 * 1024 * 1024,
        ),
        cost_estimate=cost,
    )(x2d, w2d)

    if hidden_pad != hidden:
        out2d = out2d[:, :hidden]
    return out2d.reshape(orig_shape)


def _rmsnorm_ref(x, w, eps):
    # Pure-JAX reference mirroring the PyTorch module (f32 math, cast back).
    xf = x.astype(jnp.float32)
    var = jnp.mean(xf * xf, axis=-1, keepdims=True)
    y = xf * jax.lax.rsqrt(var + eps)
    return (w.astype(jnp.float32) * y).astype(x.dtype)


if __name__ == "__main__":
    key = jax.random.PRNGKey(0)
    k_x, k_w, k_x2, k_w2, k_x3, k_w3 = jax.random.split(key, 6)
    eps = 1e-5

    # Test 1: chatglm2-style small bf16 shapes.
    batch, seq, hidden = 2, 8, 128
    weight = jax.random.normal(k_w, (hidden,), dtype=jnp.float32).astype(jnp.bfloat16)
    hidden_states = jax.random.normal(
        k_x, (batch, seq, hidden), dtype=jnp.float32
    ).astype(jnp.bfloat16)

    out = jax.block_until_ready(rmsnorm(hidden_states, weight, eps))
    assert out.shape == hidden_states.shape
    assert out.dtype == hidden_states.dtype
    ref = _rmsnorm_ref(hidden_states, weight, eps).astype(jnp.float32)
    diff = jnp.abs(out.astype(jnp.float32) - ref)
    ok = bool(jnp.all(diff <= 2e-2 * (jnp.abs(ref) + 1.0)))
    assert ok, f"bf16 mismatch: max abs diff {float(jnp.max(diff))}"

    # Test 2: f32 with a non-divisible row count (exercises the partial tail block).
    batch2, seq2, hidden2 = 2, 7, 256
    weight2 = jax.random.normal(k_w2, (hidden2,), dtype=jnp.float32)
    x2 = jax.random.normal(k_x2, (batch2, seq2, hidden2), dtype=jnp.float32)
    out2 = jax.block_until_ready(rmsnorm(x2, weight2, eps))
    ref2 = _rmsnorm_ref(x2, weight2, eps)
    err2 = float(jnp.max(jnp.abs(out2 - ref2)))
    assert out2.shape == x2.shape and out2.dtype == x2.dtype
    assert err2 < 1e-4, f"f32 mismatch: max abs error {err2}"

    # Test 3: f32 with hidden % 128 != 0 (exercises the lane-padding path).
    batch3, seq3, hidden3 = 2, 5, 100
    weight3 = jax.random.normal(k_w3, (hidden3,), dtype=jnp.float32)
    x3 = jax.random.normal(k_x3, (batch3, seq3, hidden3), dtype=jnp.float32)
    out3 = jax.block_until_ready(rmsnorm(x3, weight3, eps))
    ref3 = _rmsnorm_ref(x3, weight3, eps)
    err3 = float(jnp.max(jnp.abs(out3 - ref3)))
    assert out3.shape == x3.shape and out3.dtype == x3.dtype
    assert err3 < 1e-4, f"odd-hidden f32 mismatch: max abs error {err3}"

    print("KERNEL_OK")
</pallas_src>

<mosaic_0001>
module attributes {stable_mosaic.version = 11 : i64} {
  func.func @_rmsnorm_kernel(%arg0: i32, %arg1: memref<16x128xbf16, #tpu.memory_space<vmem>>, %arg2: memref<1x128xbf16, #tpu.memory_space<vmem>>, %arg3: memref<16x128xbf16, #tpu.memory_space<vmem>>) attributes {dimension_semantics = [#tpu.dimension_semantics<parallel>], iteration_bounds = array<i64: 1>, scalar_prefetch = 0 : i64, scratch_operands = 0 : i64, tpu.core_type = #tpu.core_type<tc>, window_params = [{transform_indices = @transform_0, window_bounds = array<i64: 16, 128>}, {pipeline_mode = #tpu.pipeline_mode<synchronous>, transform_indices = @transform_1, window_bounds = array<i64: 1, 128>}, {transform_indices = @transform_2, window_bounds = array<i64: 16, 128>}]} {
    %c0 = arith.constant 0 : index
    %c0_0 = arith.constant 0 : index
    %0 = vector.load %arg1[%c0, %c0_0] : memref<16x128xbf16, #tpu.memory_space<vmem>>, vector<16x128xbf16>
    %1 = arith.extf %0 : vector<16x128xbf16> to vector<16x128xf32>
    %2 = arith.mulf %1, %1 : vector<16x128xf32>
    %cst = arith.constant dense<0.000000e+00> : vector<16xf32>
    %3 = vector.multi_reduction <add>, %2, %cst [1] : vector<16x128xf32> to vector<16xf32>
    %4 = vector.shape_cast %3 : vector<16xf32> to vector<16x1xf32>
    %cst_1 = arith.constant 7.812500e-03 : f32
    %5 = vector.broadcast %cst_1 : f32 to vector<16x1xf32>
    %6 = arith.mulf %4, %5 : vector<16x1xf32>
    %cst_2 = arith.constant 9.99999974E-6 : f32
    %7 = vector.broadcast %cst_2 : f32 to vector<16x1xf32>
    %8 = arith.addf %6, %7 : vector<16x1xf32>
    %9 = math.rsqrt %8 : vector<16x1xf32>
    %c0_3 = arith.constant 0 : index
    %c0_4 = arith.constant 0 : index
    %10 = vector.load %arg2[%c0_3, %c0_4] : memref<1x128xbf16, #tpu.memory_space<vmem>>, vector<1x128xbf16>
    %11 = arith.extf %10 : vector<1x128xbf16> to vector<1x128xf32>
    %12 = vector.broadcast %9 : vector<16x1xf32> to vector<16x128xf32>
    %13 = arith.mulf %1, %12 : vector<16x128xf32>
    %14 = vector.broadcast %11 : vector<1x128xf32> to vector<16x128xf32>
    %15 = arith.mulf %14, %13 : vector<16x128xf32>
    %16 = arith.truncf %15 : vector<16x128xf32> to vector<16x128xbf16>
    %c0_5 = arith.constant 0 : index
    %c0_6 = arith.constant 0 : index
    %17 = vector.load %arg3[%c0_5, %c0_6] : memref<16x128xbf16, #tpu.memory_space<vmem>>, vector<16x128xbf16>
    tpu.vector_store %arg3[%c0_5, %c0_6], %16 {strides = array<i32>} : memref<16x128xbf16, #tpu.memory_space<vmem>>, vector<16x128xbf16>,
    return
  }
  func.func @transform_0(%arg0: i32) -> (i32, i32) {
    %c0_i32 = arith.constant 0 : i32
    %c0_i32_0 = arith.constant 0 : i32
    return %arg0, %c0_i32 : i32, i32
  }
  func.func @transform_1(%arg0: i32) -> (i32, i32) {
    %c0_i32 = arith.constant 0 : i32
    %c0_i32_0 = arith.constant 0 : i32
    %c0_i32_1 = arith.constant 0 : i32
    return %c0_i32, %c0_i32_0 : i32, i32
  }
  func.func @transform_2(%arg0: i32) -> (i32, i32) {
    %c0_i32 = arith.constant 0 : i32
    %c0_i32_0 = arith.constant 0 : i32
    return %arg0, %c0_i32 : i32, i32
  }
}

</mosaic_0001>

<llo_original>
// kernel: tpu_custom_call.1
$region0: #{tpu_custom_call.1}
  #allocation0 [shape = 'u32[]', space=smem, size = 0x4, offset = 0x4, fixed_abs, tag = 'smem constant byte address 0x4 - core index']
  #allocation1 [shape = 'u32[144,128]{1,0:T(1,128)}', space=vmem, size = 0x12000, scoped, tag = 'internal scratch']
  %s0 = inlined_call_operand.hbm [shape: bf16[16,128], index: 0, kind: input, shape index: {}]
  %s1 = inlined_call_operand.vmem [shape: bf16[1,128], index: 1, kind: input, shape index: {}]
  %s2 = inlined_call_operand.hbm [shape: bf16[16,128], index: 2, kind: output, shape index: {}]
  %s3 = sld [smem:[#allocation0]]
  $region22: #{tpu_custom_call.1} parent=0
    _
  %s5 = ssub.s32 1, %s3
  %s6 = scalar_select 0, %s5, %s3
  $region1: #{tpu_custom_call.1} parent=0
    #allocation2 [shape = 'u8[4096]{0}', space=vmem, size = 0x1000, scoped, tag = 'input window, operand 0, single buffered']
    #allocation3 [shape = 's32[1]{0}', space=sflag, size = 0x4, scoped, tag = 'scoped memory for tpu_custom_call.1']
    #allocation4 [shape = 's32[1]{0}', space=sflag, size = 0x4, scoped, tag = 'scoped memory for tpu_custom_call.1']
    #allocation5 [shape = 'u8[4096]{0}', space=vmem, size = 0x1000, scoped, tag = 'output window, operand 0, single buffered']
    %7 = vsyncpa [#allocation3], 0
    %8 = vsyncpa [#allocation4], 0
    // Predicated region
    $region2: #{tpu_custom_call.1} parent=1 // pred_check
      _
    $region3: #{tpu_custom_call.1} parent=1 // pred_check_branch
      %10 = sbr.rel (0) target = $region5
    $region4: #{tpu_custom_call.1} parent=1 // pred_region
      %s12 = ssub.s32 128, 128
      %13 = vsyncadd [#allocation3], %s12
      %s14 = sshll.u32 [#allocation2], 4
      %s15 = int_to_ptr.vmem [resolvable:$true] %s14
      %20 = dma.hbm_to_vmem [thread:$0]  %s0, 128, %s15, [#allocation3], 64, 64, 4
    $region5: #{tpu_custom_call.1} parent=1 // pred_fallthru
      _
    // Predicated region
    $region6: #{tpu_custom_call.1} parent=1 // pred_check
      _
    $region7: #{tpu_custom_call.1} parent=1 // pred_check_branch
      %22 = sbr.rel (0) target = $region9
    $region8: #{tpu_custom_call.1} parent=1 // pred_region
      _
    $region9: #{tpu_custom_call.1} parent=1 // pred_fallthru
      _
    // Predicated region
    $region10: #{tpu_custom_call.1} parent=1 // pred_check
      _
    $region11: #{tpu_custom_call.1} parent=1 // pred_check_branch
      %24 = sbr.rel (0) target = $region13
    $region12: #{tpu_custom_call.1} parent=1 // pred_region
      %25 = dma.done [#allocation3], 128
    $region13: #{tpu_custom_call.1} parent=1 // pred_fallthru
      _
    %v26 = vld [vmem:[#allocation2] sm:$0xf]
    %v27 = vld [vmem:[#allocation2 + $0x4] sm:$0xf]
    %v28 = vunpack.c.l.bf16 %v26
    %v29 = vunpack.c.l.bf16 %v27
    %v30 = vmul.f32 %v28, %v28
    %v31 = vmul.f32 %v29, %v29
    %32 = vadd.xlane.f32.xlu0 %v30
    %v33 = vpop.xlane.xlu0 %32
    %34 = vadd.xlane.f32.xlu0 %v31
    %v35 = vpop.xlane.xlu0 %34
    %v36 = vmul.f32 %v33, 0.0078125
    %v37 = vmul.f32 %v35, 0.0078125
    %v38 = vadd.f32 %v36, 1e-05
    %v39 = vadd.f32 %v37, 1e-05
    %v40 = vrsqrt.pop %v38
    %v41 = vrsqrt.pop %v39
    %v42 = vld [vmem:[%s1] sm:$0x1]
    %v43 = vunpack.c.l.bf16 %v42
    %v44 = vmul.f32 %v28, %v40
    %v45 = vmul.f32 %v29, %v41
    %v46 = vlaneseq
    %v47 = vshrl.u32 %v46, 7
    %v48 = vsub.s32 0, %v47
    %v49 = vrot.slane %v43, %v48
    %v50 = vmul.f32 %v49, %v44
    %v51 = vmul.f32 %v49, %v45
    %v52 = vpack.c.bf16 %v51, %v50
    %v54 = vunpack.c.l.b16 %v52
    %v55 = vunpack.c.h.b16 %v52
    %v56 = vpack.c.b16 %v54, %v54
    %v57 = vpack.c.b16 %v55, %v55
    %60 = vst [vmem:[#allocation5] sm:$0xf] %v56
    %61 = vst [vmem:[#allocation5 + $0x4] sm:$0xf] %v57
    // Predicated region
    $region14: #{tpu_custom_call.1} parent=1 // pred_check
      _
    $region15: #{tpu_custom_call.1} parent=1 // pred_check_branch
      %63 = sbr.rel (0) target = $region17
    $region16: #{tpu_custom_call.1} parent=1 // pred_region
      %s65 = ssub.s32 128, 128
      %66 = vsyncadd [#allocation4], %s65
      %s67 = sshll.u32 [#allocation5], 4
      %s68 = int_to_ptr.vmem [resolvable:$true] %s67
      %73 = dma.vmem_to_hbm [thread:$0]  %s68, 128, %s2, [#allocation4], 64, 64, 4
    $region17: #{tpu_custom_call.1} parent=1 // pred_fallthru
      _
    // Predicated region
    $region18: #{tpu_custom_call.1} parent=1 // pred_check
      _
    $region19: #{tpu_custom_call.1} parent=1 // pred_check_branch
      %75 = sbr.rel (0) target = $region21
    $region20: #{tpu_custom_call.1} parent=1 // pred_region
      %76 = dma.done [#allocation4], 128
    $region21: #{tpu_custom_call.1} parent=1 // pred_fallthru
      _
    %77 = vsyncpa [#allocation3], 1
    %78 = vsyncpa [#allocation4], 1

</llo_original>
